<compile_context>
chip_gen: v7x
topology: tpu7x:2x2x1
jax: 0.10.0
libtpu: 0.0.40
codegen_flags: <defaults>
</compile_context>

<pallas_src>
import jax
import jax.numpy as jnp
from jax.experimental import pallas as pl
from jax.experimental.pallas import tpu as pltpu

_LANES = 128
# 8192 rows x 128 lanes x 4 B = 4 MiB per buffer; double-buffered input +
# output => ~16 MiB of VMEM.  Large enough to sit near HBM roofline on
# v5e/v6e/v7x while leaving ample headroom under the explicit vmem limit.
_TILE_ROWS_CAP = 8192


def _round_up(n: int, m: int) -> int:
    return ((n + m - 1) // m) * m


def _dynamic_relu_kernel(factor_ref, x_ref, o_ref):
    # factor_ref: (1,) f32 scalar in SMEM; x_ref/o_ref: (tile_rows, 128) VMEM.
    x = x_ref[...]
    f = factor_ref[0].astype(x.dtype)       # compute in the tile's native dtype
    o_ref[...] = jnp.maximum(x, 0) * f


def dynamic_relu_a(x: jax.Array, factor) -> jax.Array:
    """relu(x) * factor via a Pallas TPU kernel.  Works for any input shape."""
    orig_shape = x.shape
    total = x.size

    flat = x.reshape(-1)
    # Lane alignment: only pad when total is not a multiple of 128 (never
    # fires for typical conv/linear activations).
    # TODO(synk): handle the <128-element tail with a masked store instead of
    # a whole-array pad for the rare unaligned case.
    padded_total = _round_up(total, _LANES)
    if padded_total != total:
        flat = jnp.pad(flat, (0, padded_total - total))
    rows = padded_total // _LANES
    x2d = flat.reshape(rows, _LANES)

    # Tile selection.  tile_rows is a multiple of 8 (so the BlockSpec meets
    # the (8,128) constraint) and need NOT divide `rows`: Pallas handles the
    # ragged last block, which is safe for this elementwise op.
    if rows <= 8:
        tile_rows = rows                     # single full block (always legal)
    else:
        # >= 2 grid steps so ("parallel",) can use both TensorCores on v7x;
        # capped so large activations stream in ~4 MiB/buffer blocks.
        tile_rows = min(_TILE_ROWS_CAP, _round_up(pl.cdiv(rows, 2), 8))
    grid = (pl.cdiv(rows, tile_rows),)

    # VMEM budget: input + output, each double-buffered = 4x tile bytes; add
    # headroom and set explicitly (v5e's scoped default is only 16 MiB).
    tile_bytes = tile_rows * _LANES * x2d.dtype.itemsize
    vmem_limit = int(min(100 << 20, max(16 << 20, 6 * tile_bytes)))

    factor_arr = jnp.asarray(factor, dtype=jnp.float32).reshape(1)

    out = pl.pallas_call(
        _dynamic_relu_kernel,
        out_shape=jax.ShapeDtypeStruct((rows, _LANES), x2d.dtype),
        grid_spec=pltpu.PrefetchScalarGridSpec(
            num_scalar_prefetch=0,
            grid=grid,
            in_specs=[
                pl.BlockSpec(memory_space=pltpu.MemorySpace.SMEM),    # factor
                pl.BlockSpec((tile_rows, _LANES), lambda i: (i, 0)),  # x tile
            ],
            out_specs=pl.BlockSpec((tile_rows, _LANES), lambda i: (i, 0)),
        ),
        compiler_params=pltpu.CompilerParams(
            dimension_semantics=("parallel",),
            vmem_limit_bytes=vmem_limit,
        ),
    )(factor_arr, x2d)

    out_flat = out.reshape(-1)
    if padded_total != total:
        out_flat = out_flat[:total]
    return out_flat.reshape(orig_shape)


if __name__ == "__main__":
    key = jax.random.PRNGKey(0)
    # NCHW input, matching a typical conv activation the module would see.
    x = jax.random.normal(key, (2, 4, 16, 16), dtype=jnp.float32)

    # Module default factor = 1.0; use a non-trivial value so the multiply is
    # observable in the check.
    factor = jnp.float32(1.5)

    y = jax.block_until_ready(dynamic_relu_a(x, factor))
    y_ref = jnp.maximum(x, 0.0) * factor
    assert y.shape == x.shape and y.dtype == x.dtype
    assert jnp.allclose(y, y_ref, atol=1e-6, rtol=1e-6)

    # Large activation: exercises the big-tile, multi-grid-step path.
    x_big = jax.random.normal(jax.random.PRNGKey(1), (8, 64, 64, 64), dtype=jnp.float32)
    y_big = jax.block_until_ready(dynamic_relu_a(x_big, factor))
    assert jnp.allclose(y_big, jnp.maximum(x_big, 0.0) * factor, atol=1e-6, rtol=1e-6)

    # Ragged-last-block path (rows not a multiple of tile_rows).
    x_rag = jax.random.normal(jax.random.PRNGKey(2), (2, 4, 16, 20), dtype=jnp.float32)
    y_rag = jax.block_until_ready(dynamic_relu_a(x_rag, factor))
    assert jnp.allclose(y_rag, jnp.maximum(x_rag, 0.0) * factor, atol=1e-6, rtol=1e-6)

    # Lane-unaligned total (tail-pad fallback path).
    x_odd = jax.random.normal(jax.random.PRNGKey(3), (3, 5, 7), dtype=jnp.float32)
    y_odd = jax.block_until_ready(dynamic_relu_a(x_odd, factor))
    assert jnp.allclose(y_odd, jnp.maximum(x_odd, 0.0) * factor, atol=1e-6, rtol=1e-6)

    print("KERNEL_OK")
</pallas_src>

<mosaic_0001>
module attributes {stable_mosaic.version = 11 : i64} {
  func.func @_dynamic_relu_kernel(%arg0: i32, %arg1: memref<1xf32, #tpu.memory_space<smem>>, %arg2: memref<8x128xf32, #tpu.memory_space<vmem>>, %arg3: memref<8x128xf32, #tpu.memory_space<vmem>>) attributes {dimension_semantics = [#tpu.dimension_semantics<parallel>], iteration_bounds = array<i64: 2>, scalar_prefetch = 0 : i64, scratch_operands = 0 : i64, tpu.core_type = #tpu.core_type<tc>, window_params = [{transform_indices = @transform_0, window_bounds = array<i64: 1>}, {transform_indices = @transform_1, window_bounds = array<i64: 8, 128>}, {transform_indices = @transform_2, window_bounds = array<i64: 8, 128>}]} {
    %c0 = arith.constant 0 : index
    %c0_0 = arith.constant 0 : index
    %0 = vector.load %arg2[%c0, %c0_0] : memref<8x128xf32, #tpu.memory_space<vmem>>, vector<8x128xf32>
    %c0_1 = arith.constant 0 : index
    %1 = memref.load %arg1[%c0_1] : memref<1xf32, #tpu.memory_space<smem>>
    %cst = arith.constant 0.000000e+00 : f32
    %2 = vector.broadcast %cst : f32 to vector<8x128xf32>
    %3 = arith.maximumf %0, %2 : vector<8x128xf32>
    %4 = vector.broadcast %1 : f32 to vector<8x128xf32>
    %5 = arith.mulf %3, %4 : vector<8x128xf32>
    %c0_2 = arith.constant 0 : index
    %c0_3 = arith.constant 0 : index
    %6 = vector.load %arg3[%c0_2, %c0_3] : memref<8x128xf32, #tpu.memory_space<vmem>>, vector<8x128xf32>
    tpu.vector_store %arg3[%c0_2, %c0_3], %5 {strides = array<i32>} : memref<8x128xf32, #tpu.memory_space<vmem>>, vector<8x128xf32>,
    return
  }
  func.func @transform_0(%arg0: i32) -> i32 {
    %c0_i32 = arith.constant 0 : i32
    %c0_i32_0 = arith.constant 0 : i32
    return %c0_i32 : i32
  }
  func.func @transform_1(%arg0: i32) -> (i32, i32) {
    %c0_i32 = arith.constant 0 : i32
    %c0_i32_0 = arith.constant 0 : i32
    return %arg0, %c0_i32 : i32, i32
  }
  func.func @transform_2(%arg0: i32) -> (i32, i32) {
    %c0_i32 = arith.constant 0 : i32
    %c0_i32_0 = arith.constant 0 : i32
    return %arg0, %c0_i32 : i32, i32
  }
}

</mosaic_0001>

<llo_original>
// kernel: tpu_custom_call.1
$region0: #{tpu_custom_call.1}
  #allocation0 [shape = 'u32[]', space=smem, size = 0x4, offset = 0x4, fixed_abs, tag = 'smem constant byte address 0x4 - core index']
  #allocation1 [shape = 'u32[144,128]{1,0:T(1,128)}', space=vmem, size = 0x12000, scoped, tag = 'internal scratch']
  #allocation2 [shape = 'f32[1]{0:T(128)S(6)}', space=smem, size = 0x200, scoped, tag = 'scoped memory for tpu_custom_call.1']
  %s0 = inlined_call_operand.<no memory space> [shape: f32[1], index: 0, kind: input, shape index: {}]
  %s1 = inlined_call_operand.hbm [shape: f32[16,128], index: 1, kind: input, shape index: {}]
  %s2 = inlined_call_operand.hbm [shape: f32[16,128], index: 2, kind: output, shape index: {}]
  %s3 = sld [smem:[#allocation0]]
  $region45: #{tpu_custom_call.1} parent=0
    _
  %s5 = ssub.s32 1, %s3
  %s6 = scalar_select 0, %s5, %s3
  %7 = sst [smem:[#allocation2]] %s0
  $region1: #{tpu_custom_call.1} parent=0
    #allocation3 [shape = 'u8[8192]{0}', space=vmem, size = 0x2000, scoped, tag = 'input window, operand 1']
    #allocation4 [shape = 's32[2]{0}', space=sflag, size = 0x8, scoped, tag = 'scoped memory for tpu_custom_call.1']
    #allocation5 [shape = 's32[2]{0}', space=sflag, size = 0x8, scoped, tag = 'scoped memory for tpu_custom_call.1']
    #allocation6 [shape = 'u8[8192]{0}', space=vmem, size = 0x2000, scoped, tag = 'output window, operand 0']
    %8 = vsyncpa [#allocation4], 0
    %s9 = scalar_lea.sflag [#allocation4], 1
    %10 = vsyncpa %s9, 0
    %11 = vsyncpa [#allocation5], 0
    %s12 = scalar_lea.sflag [#allocation5], 1
    %13 = vsyncpa %s12, 0
    loop: start=0, step=1, limit=4
    $region2: #{tpu_custom_call.1} parent=1 // loop_pre_header
      _
    $region3: #{tpu_custom_call.1} parent=1 // loop_header
      %s15 = sphi 0, %s19
      %p16 = scmp.ge.s32.totalorder %s15, 4
      %s23 = sphi 0, %s23
      %s25 = sphi 0, %s23
      %s26 = sphi 0, %s25
      %s40 = sphi 0, %s26
      %s46 = sphi 0, %s48
      %s49 = sphi 0, %s46
      %s50 = sphi 0, %s49
      %s66 = sphi 0, %s50
      %s72 = sphi 0, %s74
      %s75 = sphi 0, %s72
      %s76 = sphi 0, %s75
      %s92 = sphi 0, %s76
    $region4: #{tpu_custom_call.1} parent=1 // loop_header_branch
      %18 = sbr.rel (%p16) target = $region8
    $region5: #{tpu_custom_call.1} parent=1 // loop_body
      %s20 = ssub.s32 %s15, 1
      %s21 = ssub.s32 %s15, 2
      %s22 = sadd.s32 %s15, 1
      %s24 = sadd.s32 %s23, 1
      %p27 = scmp.eq.s32.totalorder %s15, 1
      %p28 = scmp.ne.s32.totalorder %s23, %s25
      %p29 = scmp.eq.s32.totalorder %s15, 0
      %p30 = por %p28, %p29
      %p31 = scmp.ne.s32.totalorder %s23, %s25
      %p32 = scmp.eq.s32.totalorder %s20, 1
      %p33 = por %p31, %p32
      %p34 = scmp.ne.s32.totalorder %s25, %s26
      %p35 = scmp.eq.s32.totalorder %s20, 0
      %p36 = por %p34, %p35
      %p37 = scmp.ne.s32.totalorder %s25, %s26
      %p38 = scmp.eq.s32.totalorder %s21, 1
      %p39 = por %p37, %p38
      %p41 = scmp.ne.s32.totalorder %s26, %s40
      %p42 = scmp.eq.s32.totalorder %s21, 0
      %p43 = por %p41, %p42
      %s44 = ssub.s32 %s15, %s22
      %p45 = scmp.eq.s32.totalorder %s44, 0
      %s47 = sadd.s32 %s46, 1
      %s48 = scalar_select %p45, %s46, %s47
      %p51 = pneg %p45
      %p52 = scmp.eq.s32.totalorder %s15, 1
      %p53 = por %p51, %p52
      %p54 = scmp.ne.s32.totalorder %s46, %s49
      %p55 = scmp.eq.s32.totalorder %s15, 0
      %p56 = por %p54, %p55
      %p57 = scmp.ne.s32.totalorder %s46, %s49
      %p58 = scmp.eq.s32.totalorder %s20, 1
      %p59 = por %p57, %p58
      %p60 = scmp.ne.s32.totalorder %s49, %s50
      %p61 = scmp.eq.s32.totalorder %s20, 0
      %p62 = por %p60, %p61
      %p63 = scmp.ne.s32.totalorder %s49, %s50
      %p64 = scmp.eq.s32.totalorder %s21, 1
      %p65 = por %p63, %p64
      %p67 = scmp.ne.s32.totalorder %s50, %s66
      %p68 = scmp.eq.s32.totalorder %s21, 0
      %p69 = por %p67, %p68
      %s70 = ssub.s32 %s15, %s22
      %p71 = scmp.eq.s32.totalorder %s70, 0
      %s73 = sadd.s32 %s72, 1
      %s74 = scalar_select %p71, %s72, %s73
      %p77 = pneg %p71
      %p78 = scmp.eq.s32.totalorder %s15, 1
      %p79 = por %p77, %p78
      %p80 = scmp.ne.s32.totalorder %s72, %s75
      %p81 = scmp.eq.s32.totalorder %s15, 0
      %p82 = por %p80, %p81
      %p83 = scmp.ne.s32.totalorder %s72, %s75
      %p84 = scmp.eq.s32.totalorder %s20, 1
      %p85 = por %p83, %p84
      %p86 = scmp.ne.s32.totalorder %s75, %s76
      %p87 = scmp.eq.s32.totalorder %s20, 0
      %p88 = por %p86, %p87
      %p89 = scmp.ne.s32.totalorder %s75, %s76
      %p90 = scmp.eq.s32.totalorder %s21, 1
      %p91 = por %p89, %p90
      %p93 = scmp.ne.s32.totalorder %s76, %s92
      %p94 = scmp.eq.s32.totalorder %s21, 0
      %p95 = por %p93, %p94
      %p96 = scmp.le.s32.totalorder 1, %s15
      %p97 = scmp.lt.s32.totalorder %s15, 3
      %p98 = pnand %p96, %p97
      %p99 = pneg %p98
      // Predicated region
      $region9: #{tpu_custom_call.1} parent=5 // pred_check
        _
      $region10: #{tpu_custom_call.1} parent=5 // pred_check_branch
        %101 = sbr.rel (%p98) target = $region12
      $region11: #{tpu_custom_call.1} parent=5 // pred_region
        %s102 = ssub.s32 %s15, 1
        // Predicated region
        $region13: #{tpu_custom_call.1} parent=11 // pred_check
          %p103 = pneg %p36
        $region14: #{tpu_custom_call.1} parent=11 // pred_check_branch
          %105 = sbr.rel (%p103) target = $region16
        $region15: #{tpu_custom_call.1} parent=11 // pred_region
          _
        $region16: #{tpu_custom_call.1} parent=11 // pred_fallthru
          _
      $region12: #{tpu_custom_call.1} parent=5 // pred_fallthru
        _
      %p106 = scmp.lt.s32.totalorder %s15, 2
      // Predicated region
      $region17: #{tpu_custom_call.1} parent=5 // pred_check
        %p107 = pneg %p106
      $region18: #{tpu_custom_call.1} parent=5 // pred_check_branch
        %109 = sbr.rel (%p107) target = $region20
      $region19: #{tpu_custom_call.1} parent=5 // pred_region
        // Predicated region
        $region21: #{tpu_custom_call.1} parent=19 // pred_check
          %p110 = pneg %p56
        $region22: #{tpu_custom_call.1} parent=19 // pred_check_branch
          %112 = sbr.rel (%p110) target = $region24
        $region23: #{tpu_custom_call.1} parent=19 // pred_region
          %s113 = sand.u32 %s46, 1
          %s114 = scalar_lea.sflag [#allocation4], %s113
          %s115 = sand.u32 %s46, 1
          %s116 = smul.addr %s115, 8
          %s117 = scalar_lea.vmem [#allocation3], %s116
          %s119 = ssub.s32 128, 128
          %120 = vsyncadd %s114, %s119
          %s121 = smul.addr %s15, 128
          %s122 = scalar_lea.hbm %s1, %s121
          %s124 = sshll.u32 %s117, 4
          %s125 = int_to_ptr.vmem [resolvable:$true] %s124
          %127 = dma.hbm_to_vmem [thread:$0]  %s122, 128, %s125, %s114
        $region24: #{tpu_custom_call.1} parent=19 // pred_fallthru
          _
      $region20: #{tpu_custom_call.1} parent=5 // pred_fallthru
        _
      %p128 = scmp.le.s32.totalorder 1, %s15
      %p129 = scmp.lt.s32.totalorder %s15, 3
      %p130 = pnand %p128, %p129
      %p131 = pneg %p130
      // Predicated region
      $region25: #{tpu_custom_call.1} parent=5 // pred_check
        _
      $region26: #{tpu_custom_call.1} parent=5 // pred_check_branch
        %133 = sbr.rel (%p130) target = $region28
      $region27: #{tpu_custom_call.1} parent=5 // pred_region
        %s134 = ssub.s32 %s15, 1
        %s135 = sand.u32 %s49, 1
        %s136 = scalar_lea.sflag [#allocation4], %s135
        %s137 = sand.u32 %s49, 1
        %s138 = smul.addr %s137, 8
        %s139 = scalar_lea.vmem [#allocation3], %s138
        // Predicated region
        $region29: #{tpu_custom_call.1} parent=27 // pred_check
          %p140 = pneg %p62
        $region30: #{tpu_custom_call.1} parent=27 // pred_check_branch
          %142 = sbr.rel (%p140) target = $region32
        $region31: #{tpu_custom_call.1} parent=27 // pred_region
          %143 = dma.done %s136, 128
        $region32: #{tpu_custom_call.1} parent=27 // pred_fallthru
          _
        %p144 = pneg %p36
        %p145 = pneg %p33
        %s146 = sand.u32 %s49, 1
        %s147 = scalar_lea.sflag [#allocation4], %s146
        %s148 = sand.u32 %s49, 1
        %s149 = smul.addr %s148, 8
        %s150 = scalar_lea.vmem [#allocation3], %s149
        %p151 = pneg %p62
        %p152 = pneg %p59
        %p153 = pneg %p88
        %p154 = pneg %p85
        %s155 = sand.u32 %s75, 1
        %s156 = scalar_lea.sflag [#allocation5], %s155
        %s157 = sand.u32 %s75, 1
        %s158 = smul.addr %s157, 8
        %s159 = scalar_lea.vmem [#allocation6], %s158
        %v160 = vld [vmem:[%s139] sm:$0xff]
        %s161 = sld [smem:[#allocation2]]
        %v162 = vmax.f32 %v160, 0.0
        %v163 = vstv %s161
        %v164 = vmul.f32 %v162, %v163
        %165 = vst [vmem:[%s159] sm:$0xff] %v164
        %s166 = sand.u32 %s75, 1
        %s167 = scalar_lea.sflag [#allocation5], %s166
        %s168 = sand.u32 %s75, 1
        %s169 = smul.addr %s168, 8
        %s170 = scalar_lea.vmem [#allocation6], %s169
        // Predicated region
        $region33: #{tpu_custom_call.1} parent=27 // pred_check
          %p171 = pneg %p85
        $region34: #{tpu_custom_call.1} parent=27 // pred_check_branch
          %173 = sbr.rel (%p171) target = $region36
        $region35: #{tpu_custom_call.1} parent=27 // pred_region
          %s175 = ssub.s32 128, 128
          %176 = vsyncadd %s167, %s175
          %s177 = smul.addr %s20, 128
          %s178 = scalar_lea.hbm %s2, %s177
          %s180 = sshll.u32 %s170, 4
          %s181 = int_to_ptr.vmem [resolvable:$true] %s180
          %183 = dma.vmem_to_hbm [thread:$0]  %s181, 128, %s178, %s167
        $region36: #{tpu_custom_call.1} parent=27 // pred_fallthru
          _
      $region28: #{tpu_custom_call.1} parent=5 // pred_fallthru
        _
      %p184 = scmp.le.s32.totalorder 2, %s15
      // Predicated region
      $region37: #{tpu_custom_call.1} parent=5 // pred_check
        %p185 = pneg %p184
      $region38: #{tpu_custom_call.1} parent=5 // pred_check_branch
        %187 = sbr.rel (%p185) target = $region40
      $region39: #{tpu_custom_call.1} parent=5 // pred_region
        %s188 = ssub.s32 %s15, 2
        // Predicated region
        $region41: #{tpu_custom_call.1} parent=39 // pred_check
          %p189 = pneg %p91
        $region42: #{tpu_custom_call.1} parent=39 // pred_check_branch
          %191 = sbr.rel (%p189) target = $region44
        $region43: #{tpu_custom_call.1} parent=39 // pred_region
          %s192 = sand.u32 %s76, 1
          %s193 = scalar_lea.sflag [#allocation5], %s192
          %s194 = sand.u32 %s76, 1
          %s195 = smul.addr %s194, 8
          %s196 = scalar_lea.vmem [#allocation6], %s195
          %197 = dma.done %s193, 128
        $region44: #{tpu_custom_call.1} parent=39 // pred_fallthru
          _
      $region40: #{tpu_custom_call.1} parent=5 // pred_fallthru
        _
    $region6: #{tpu_custom_call.1} parent=1 // loop_footer
      %s19 = sadd.s32 1, %s15
    $region7: #{tpu_custom_call.1} parent=1 // loop_footer_branch
      %14 = sbr.rel target = $region3
    $region8: #{tpu_custom_call.1} parent=1 // loop_exit
      _
    %198 = vsyncpa [#allocation4], 1
    %s199 = scalar_lea.sflag [#allocation4], 1
    %200 = vsyncpa %s199, 1
    %201 = vsyncpa [#allocation5], 1
    %s202 = scalar_lea.sflag [#allocation5], 1
    %203 = vsyncpa %s202, 1

</llo_original>
